<compile_context>
chip_gen: v7x
topology: tpu7x:2x2x1
jax: 0.10.0
libtpu: 0.0.40
codegen_flags: <defaults>
</compile_context>

<pallas_src>
import functools

import jax
import jax.numpy as jnp
from jax.experimental import pallas as pl
from jax.experimental.pallas import tpu as pltpu


def _round_up(x, m):
    return (x + m - 1) // m * m


# ---------------------------------------------------------------------------
# Fused propagation kernel.
# Grid = (K/tk, M/tm) with k (spot tiles) outer, i (user tiles) inner.
#   A tile         : (tm, tk)    bf16, streamed from HBM, read exactly once
#   spot_x tile    : (tk, H)     bf16, re-fetched only when k advances
#   user_x^T tile  : (H, tm)     bf16, tiny, re-fetched per step
#   spot_out^T     : (H, tk)     f32, accumulated over the inner i loop
#   user_out       : (Mpad, H)   f32, fully VMEM resident, accumulated over k
# ---------------------------------------------------------------------------
def _fused_layer_kernel(a_ref, sx_ref, uxt_ref, sot_ref, uo_ref, *, tm):
    k = pl.program_id(0)                       # spot-tile index (outer)
    i = pl.program_id(1)                       # user-tile index (inner)
    off = pl.multiple_of(i * tm, tm)

    # Fresh spot_out^T accumulator each time a new k block starts.
    @pl.when(i == 0)
    def _():
        sot_ref[...] = jnp.zeros_like(sot_ref)

    # user_out lives in VMEM for the whole grid; zero each i slab on first k.
    @pl.when(k == 0)
    def _():
        uo_ref[pl.ds(off, tm), :] = jnp.zeros((tm, uo_ref.shape[1]), uo_ref.dtype)

    a = a_ref[...]                             # (tm, tk)  bf16
    sx = sx_ref[...]                           # (tk, H)   bf16
    uxt = uxt_ref[...]                         # (H, tm)   bf16

    # user_out[i] += A[i, k] @ spot_x[k]          : (tm,tk)@(tk,H) -> (tm,H)
    uo_ref[pl.ds(off, tm), :] += jnp.dot(
        a, sx, preferred_element_type=jnp.float32)
    # spot_out^T[k] += user_x^T[i] @ A[i, k]      : (H,tm)@(tm,tk) -> (H,tk)
    # (this IS A.T @ user_x, computed as an NN matmul -> no adj.T anywhere)
    sot_ref[...] += jnp.dot(uxt, a, preferred_element_type=jnp.float32)


def fused_propagate(adj_bf16, spot_x_bf16, user_x_t_bf16, *, tm, tk,
                    vmem_limit_bytes):
    """One propagation layer: returns (spot_out^T (H,Kpad) f32, user_out (Mpad,H) f32)."""
    m_pad, k_pad = adj_bf16.shape
    h = spot_x_bf16.shape[-1]
    assert m_pad % tm == 0 and k_pad % tk == 0

    kernel = functools.partial(_fused_layer_kernel, tm=tm)
    return pl.pallas_call(
        kernel,
        out_shape=(
            jax.ShapeDtypeStruct((h, k_pad), jnp.float32),   # spot_out^T
            jax.ShapeDtypeStruct((m_pad, h), jnp.float32),   # user_out
        ),
        grid_spec=pltpu.PrefetchScalarGridSpec(
            num_scalar_prefetch=0,
            grid=(k_pad // tk, m_pad // tm),                 # k outer, i inner
            in_specs=[
                pl.BlockSpec((tm, tk), lambda k, i: (i, k)),   # A (streamed)
                pl.BlockSpec((tk, h), lambda k, i: (k, 0)),    # spot_x tile
                pl.BlockSpec((h, tm), lambda k, i: (0, i)),    # user_x^T tile
            ],
            out_specs=(
                pl.BlockSpec((h, tk), lambda k, i: (0, k)),    # spot_out^T (acc over i)
                pl.BlockSpec((m_pad, h), lambda k, i: (0, 0)), # user_out resident (acc over k)
            ),
        ),
        compiler_params=pltpu.CompilerParams(
            # Both grid axes carry an accumulation (spot_out over i, user_out
            # over k), so neither can be marked "parallel".
            dimension_semantics=("arbitrary", "arbitrary"),
            vmem_limit_bytes=vmem_limit_bytes,
        ),
    )(adj_bf16, spot_x_bf16, user_x_t_bf16)


# ---------------------------------------------------------------------------
# Tiling / padding / VMEM budget.
# ---------------------------------------------------------------------------
def choose_tiles(n_users, m_spot, hidden, *, tm_target=512, tk_target=2048):
    # tm/tk kept multiples of 128 (lane alignment + bf16 (16,128) tiling).
    tm = min(tm_target, _round_up(n_users, 128))
    tk = min(tk_target, _round_up(m_spot, 128))
    m_pad = _round_up(n_users, tm)
    k_pad = _round_up(m_spot, tk)

    # Double-buffered VMEM estimate, with headroom, capped below v7x's 64 MiB.
    est = 2 * tm * tk * 2            # A tiles (bf16)
    est += 2 * tk * hidden * 2       # spot_x tiles (bf16)
    est += 2 * hidden * tm * 2       # user_x^T tiles (bf16)
    est += 2 * hidden * tk * 4       # spot_out^T tiles (f32)
    est += 2 * m_pad * hidden * 4    # user_out resident (f32)
    vmem_limit = int(min(48 * 1024 * 1024, max(32 * 1024 * 1024, int(est * 1.3))))
    return tm, tk, m_pad, k_pad, vmem_limit


def build_normalized_adjacency(user_idx, spot_idx, n_users, m_spot, m_pad, k_pad):
    """Dense padded normalized adjacency equivalent to UserSpotConv's per-edge div."""
    user_deg = jnp.zeros((n_users,), jnp.float32).at[user_idx].add(1.0)
    spot_deg = jnp.zeros((m_spot,), jnp.float32).at[spot_idx].add(1.0)
    div = jnp.sqrt(user_deg[user_idx] * spot_deg[spot_idx])       # per-edge norm
    adj = (jnp.zeros((m_pad, k_pad), jnp.float32)
           .at[user_idx, spot_idx].add(1.0 / div))
    return adj


# ---------------------------------------------------------------------------
# MixGCN forward: stack of fused UserSpotConv layers + ego embeddings.
# ---------------------------------------------------------------------------
def mixgcn_forward(spot_emb, user_emb, adj_bf16, *, num_layers, n_users, m_spot,
                   tm, tk, vmem_limit_bytes):
    m_pad, k_pad = adj_bf16.shape
    h = spot_emb.shape[-1]
    spot_x = jnp.zeros((k_pad, h), jnp.float32).at[:m_spot].set(spot_emb)
    user_x = jnp.zeros((m_pad, h), jnp.float32).at[:n_users].set(user_emb)

    spot_outs = [spot_x]
    user_outs = [user_x]
    for _ in range(num_layers):
        spot_out_t, user_out = fused_propagate(
            adj_bf16,
            spot_x.astype(jnp.bfloat16),
            user_x.astype(jnp.bfloat16).T,         # tiny transpose in the wrapper
            tm=tm, tk=tk, vmem_limit_bytes=vmem_limit_bytes,
        )
        spot_x, user_x = spot_out_t.T, user_out    # back to natural layout
        spot_outs.append(spot_x)
        user_outs.append(user_x)

    spot_stack = jnp.stack(spot_outs, axis=1)[:m_spot]
    user_stack = jnp.stack(user_outs, axis=1)[:n_users]
    return spot_stack, user_stack


# ---------------------------------------------------------------------------
# Main: deterministic synthetic setup (small stand-ins for the real
# 27094 users / 42852 spots), run once, verify, print KERNEL_OK.
# ---------------------------------------------------------------------------
if __name__ == "__main__":
    n_users = 300        # not a multiple of 8   -> exercises padding path
    m_spot = 520         # not a multiple of 128 -> exercises padding path
    hidden = 32          # hidden_channels
    num_layers = 2
    n_edges = 2000

    key = jax.random.PRNGKey(0)
    k_u, k_s, k_ue, k_se = jax.random.split(key, 4)

    # TODO(synk): train_edge.npy / spot_city / spot_pref / experience csv are
    # file-backed in the original module; forward() only uses the train edges,
    # which are synthesized here.
    user_idx = jax.random.randint(k_u, (n_edges,), 0, n_users)
    spot_idx = jax.random.randint(k_s, (n_edges,), 0, m_spot)

    # torch.nn.init.normal_(std=0.1) equivalents
    user_emb = 0.1 * jax.random.normal(k_ue, (n_users, hidden), jnp.float32)
    spot_emb = 0.1 * jax.random.normal(k_se, (m_spot, hidden), jnp.float32)

    # Small tile caps so the demo runs a multi-tile (3 x 3) grid and exercises
    # both accumulation paths; at real sizes use the defaults (512 / 2048).
    tm, tk, m_pad, k_pad, vmem_limit = choose_tiles(
        n_users, m_spot, hidden, tm_target=128, tk_target=256)

    adj_f32 = build_normalized_adjacency(
        user_idx, spot_idx, n_users, m_spot, m_pad, k_pad)
    adj_bf16 = adj_f32.astype(jnp.bfloat16)

    fwd = jax.jit(functools.partial(
        mixgcn_forward, num_layers=num_layers, n_users=n_users, m_spot=m_spot,
        tm=tm, tk=tk, vmem_limit_bytes=vmem_limit))
    spot_out, user_out = fwd(spot_emb, user_emb, adj_bf16)
    jax.block_until_ready((spot_out, user_out))

    assert spot_out.shape == (m_spot, num_layers + 1, hidden)
    assert user_out.shape == (n_users, num_layers + 1, hidden)

    # Reference 1: identical bf16-quantized operands, plain-JAX fp32 matmuls.
    aq = adj_bf16.astype(jnp.float32)
    sx = jnp.zeros((k_pad, hidden), jnp.float32).at[:m_spot].set(spot_emb)
    ux = jnp.zeros((m_pad, hidden), jnp.float32).at[:n_users].set(user_emb)
    s_list, u_list = [sx], [ux]
    for _ in range(num_layers):
        sq = sx.astype(jnp.bfloat16).astype(jnp.float32)
        uq = ux.astype(jnp.bfloat16).astype(jnp.float32)
        nu = jnp.dot(aq, sq, precision=jax.lax.Precision.HIGHEST)
        ns = jnp.dot(aq.T, uq, precision=jax.lax.Precision.HIGHEST)
        sx, ux = ns, nu
        s_list.append(sx)
        u_list.append(ux)
    ref_spot_q = jnp.stack(s_list, axis=1)[:m_spot]
    ref_user_q = jnp.stack(u_list, axis=1)[:n_users]
    assert jnp.allclose(spot_out, ref_spot_q, atol=1e-3, rtol=1e-2)
    assert jnp.allclose(user_out, ref_user_q, atol=1e-3, rtol=1e-2)

    # Reference 2: pure fp32 propagation (original module semantics); looser
    # tolerance accounts for bf16 operand quantization in the kernel.
    sx = jnp.zeros((k_pad, hidden), jnp.float32).at[:m_spot].set(spot_emb)
    ux = jnp.zeros((m_pad, hidden), jnp.float32).at[:n_users].set(user_emb)
    s_list, u_list = [sx], [ux]
    for _ in range(num_layers):
        nu = jnp.dot(adj_f32, sx, precision=jax.lax.Precision.HIGHEST)
        ns = jnp.dot(adj_f32.T, ux, precision=jax.lax.Precision.HIGHEST)
        sx, ux = ns, nu
        s_list.append(sx)
        u_list.append(ux)
    ref_spot = jnp.stack(s_list, axis=1)[:m_spot]
    ref_user = jnp.stack(u_list, axis=1)[:n_users]
    assert jnp.allclose(spot_out, ref_spot, atol=8e-3, rtol=8e-2)
    assert jnp.allclose(user_out, ref_user, atol=8e-3, rtol=8e-2)

    print("KERNEL_OK")
</pallas_src>

<mosaic_0001>
module attributes {stable_mosaic.version = 11 : i64} {
  func.func @_fused_layer_kernel(%arg0: i32, %arg1: i32, %arg2: memref<128x256xbf16, #tpu.memory_space<vmem>>, %arg3: memref<256x32xbf16, #tpu.memory_space<vmem>>, %arg4: memref<32x128xbf16, #tpu.memory_space<vmem>>, %arg5: memref<32x256xf32, #tpu.memory_space<vmem>>, %arg6: memref<384x32xf32, #tpu.memory_space<vmem>>) attributes {dimension_semantics = [#tpu.dimension_semantics<arbitrary>, #tpu.dimension_semantics<arbitrary>], iteration_bounds = array<i64: 3, 3>, scalar_prefetch = 0 : i64, scratch_operands = 0 : i64, tpu.core_type = #tpu.core_type<tc>, window_params = [{transform_indices = @transform_0, window_bounds = array<i64: 128, 256>}, {transform_indices = @transform_1, window_bounds = array<i64: 256, 32>}, {transform_indices = @transform_2, window_bounds = array<i64: 32, 128>}, {transform_indices = @transform_3, window_bounds = array<i64: 32, 256>}, {pipeline_mode = #tpu.pipeline_mode<synchronous>, transform_indices = @transform_4, window_bounds = array<i64: 384, 32>}]} {
    %c128_i32 = arith.constant 128 : i32
    %0 = arith.muli %arg1, %c128_i32 : i32
    %1 = tpu.assume_multiple %0, 128 : i32
    %c0_i32 = arith.constant 0 : i32
    %2 = arith.cmpi eq, %arg1, %c0_i32 : i32
    %3 = arith.extui %2 : i1 to i32
    %c0_i32_0 = arith.constant 0 : i32
    %4 = arith.cmpi ne, %3, %c0_i32_0 : i32
    scf.if %4 {
      %cst_15 = arith.constant 0.000000e+00 : f32
      %21 = vector.broadcast %cst_15 : f32 to vector<32x256xf32>
      %c0_16 = arith.constant 0 : index
      %c0_17 = arith.constant 0 : index
      %22 = vector.load %arg5[%c0_16, %c0_17] : memref<32x256xf32, #tpu.memory_space<vmem>>, vector<32x256xf32>
      tpu.vector_store %arg5[%c0_16, %c0_17], %21 {strides = array<i32>} : memref<32x256xf32, #tpu.memory_space<vmem>>, vector<32x256xf32>,
    } else {
    }
    %c0_i32_1 = arith.constant 0 : i32
    %5 = arith.cmpi eq, %arg0, %c0_i32_1 : i32
    %6 = arith.extui %5 : i1 to i32
    %c0_i32_2 = arith.constant 0 : i32
    %7 = arith.cmpi ne, %6, %c0_i32_2 : i32
    scf.if %7 {
      %cst_15 = arith.constant 0.000000e+00 : f32
      %21 = vector.broadcast %cst_15 : f32 to vector<128x32xf32>
      %22 = arith.index_cast %1 : i32 to index
      %c0_16 = arith.constant 0 : index
      %23 = vector.load %arg6[%22, %c0_16] : memref<384x32xf32, #tpu.memory_space<vmem>>, vector<128x32xf32>
      tpu.vector_store %arg6[%22, %c0_16], %21 {strides = array<i32>} : memref<384x32xf32, #tpu.memory_space<vmem>>, vector<128x32xf32>,
    } else {
    }
    %c0 = arith.constant 0 : index
    %c0_3 = arith.constant 0 : index
    %8 = vector.load %arg2[%c0, %c0_3] : memref<128x256xbf16, #tpu.memory_space<vmem>>, vector<128x256xbf16>
    %c0_4 = arith.constant 0 : index
    %c0_5 = arith.constant 0 : index
    %9 = vector.load %arg3[%c0_4, %c0_5] : memref<256x32xbf16, #tpu.memory_space<vmem>>, vector<256x32xbf16>
    %c0_6 = arith.constant 0 : index
    %c0_7 = arith.constant 0 : index
    %10 = vector.load %arg4[%c0_6, %c0_7] : memref<32x128xbf16, #tpu.memory_space<vmem>>, vector<32x128xbf16>
    %11 = arith.index_cast %1 : i32 to index
    %c0_8 = arith.constant 0 : index
    %12 = vector.load %arg6[%11, %c0_8] : memref<384x32xf32, #tpu.memory_space<vmem>>, vector<128x32xf32>
    %cst = arith.constant dense<0.000000e+00> : vector<128x32xf32>
    %13 = tpu.matmul %8, %9, %cst {dimension_numbers = #tpu.dot_dimension_numbers<[1], [0], [0], [1], [0, 0, 1, 1], [], []>} : vector<128x256xbf16>, vector<256x32xbf16>, vector<128x32xf32> -> vector<128x32xf32>
    %14 = arith.addf %12, %13 : vector<128x32xf32>
    %15 = arith.index_cast %1 : i32 to index
    %c0_9 = arith.constant 0 : index
    %16 = vector.load %arg6[%15, %c0_9] : memref<384x32xf32, #tpu.memory_space<vmem>>, vector<128x32xf32>
    tpu.vector_store %arg6[%15, %c0_9], %14 {strides = array<i32>} : memref<384x32xf32, #tpu.memory_space<vmem>>, vector<128x32xf32>,
    %c0_10 = arith.constant 0 : index
    %c0_11 = arith.constant 0 : index
    %17 = vector.load %arg5[%c0_10, %c0_11] : memref<32x256xf32, #tpu.memory_space<vmem>>, vector<32x256xf32>
    %cst_12 = arith.constant dense<0.000000e+00> : vector<32x256xf32>
    %18 = tpu.matmul %10, %8, %cst_12 {dimension_numbers = #tpu.dot_dimension_numbers<[1], [0], [0], [1], [0, 0, 1, 1], [], []>} : vector<32x128xbf16>, vector<128x256xbf16>, vector<32x256xf32> -> vector<32x256xf32>
    %19 = arith.addf %17, %18 : vector<32x256xf32>
    %c0_13 = arith.constant 0 : index
    %c0_14 = arith.constant 0 : index
    %20 = vector.load %arg5[%c0_13, %c0_14] : memref<32x256xf32, #tpu.memory_space<vmem>>, vector<32x256xf32>
    tpu.vector_store %arg5[%c0_13, %c0_14], %19 {strides = array<i32>} : memref<32x256xf32, #tpu.memory_space<vmem>>, vector<32x256xf32>,
    return
  }
  func.func @transform_0(%arg0: i32, %arg1: i32) -> (i32, i32) {
    %c0_i32 = arith.constant 0 : i32
    return %arg1, %arg0 : i32, i32
  }
  func.func @transform_1(%arg0: i32, %arg1: i32) -> (i32, i32) {
    %c0_i32 = arith.constant 0 : i32
    %c0_i32_0 = arith.constant 0 : i32
    return %arg0, %c0_i32 : i32, i32
  }
  func.func @transform_2(%arg0: i32, %arg1: i32) -> (i32, i32) {
    %c0_i32 = arith.constant 0 : i32
    %c0_i32_0 = arith.constant 0 : i32
    return %c0_i32, %arg1 : i32, i32
  }
  func.func @transform_3(%arg0: i32, %arg1: i32) -> (i32, i32) {
    %c0_i32 = arith.constant 0 : i32
    %c0_i32_0 = arith.constant 0 : i32
    return %c0_i32, %arg0 : i32, i32
  }
  func.func @transform_4(%arg0: i32, %arg1: i32) -> (i32, i32) {
    %c0_i32 = arith.constant 0 : i32
    %c0_i32_0 = arith.constant 0 : i32
    %c0_i32_1 = arith.constant 0 : i32
    return %c0_i32, %c0_i32_0 : i32, i32
  }
}

</mosaic_0001>

<llo_original>
// kernel: mixgcn_forward.2
$region0: #{mixgcn_forward.2}
  #allocation0 [shape = 'u32[]', space=smem, size = 0x4, offset = 0x4, fixed_abs, tag = 'smem constant byte address 0x4 - core index']
  #allocation1 [shape = 'u32[144,128]{1,0:T(1,128)}', space=vmem, size = 0x12000, scoped, tag = 'internal scratch']
  %s0 = inlined_call_operand.vmem [shape: bf16[384,768], index: 0, kind: input, shape index: {}]
  %s1 = inlined_call_operand.vmem [shape: bf16[768,32], index: 1, kind: input, shape index: {}]
  %s2 = inlined_call_operand.vmem [shape: bf16[32,384], index: 2, kind: input, shape index: {}]
  %s3 = inlined_call_operand.vmem [shape: f32[32,768], index: 3, kind: output, shape index: {0}]
  %s4 = inlined_call_operand.vmem [shape: f32[384,32], index: 4, kind: output, shape index: {1}]
  %5 = xla_tuple %s3, %s4
  %s6 = sld [smem:[#allocation0]]
  $region159: #{mixgcn_forward.2} parent=0
    _
  %s8 = ssub.s32 1, %s6
  %s9 = scalar_select 0, %s8, %s6
  $region1: #{mixgcn_forward.2} parent=0
    #allocation2 [shape = 'u8[131072]{0}', space=vmem, size = 0x20000, scoped, tag = 'input window, operand 0']
    #allocation3 [shape = 'u8[16384]{0}', space=vmem, size = 0x4000, scoped, tag = 'input window, operand 2']
    #allocation4 [shape = 'u8[65536]{0}', space=vmem, size = 0x10000, scoped, tag = 'output window, operand 0']
    loop: start=0, step=1, limit=11
    $region2: #{mixgcn_forward.2} parent=1 // loop_pre_header
      _
    $region3: #{mixgcn_forward.2} parent=1 // loop_header
      %s11 = sphi 0, %s15
      %p12 = scmp.ge.s32.totalorder %s11, 11
      %s18 = sphi 0, %s30
      %s19 = sphi 0, %s26
      %s20 = sphi 0, %s18
      %s21 = sphi 0, %s19
      %s22 = sphi 0, %s20
      %s23 = sphi 0, %s21
      %s35 = sphi 0, %s37
      %s38 = sphi 0, %s35
      %s39 = sphi 0, %s38
      %s55 = sphi 0, %s39
      %s61 = sphi 0, %s63
      %s64 = sphi 0, %s61
      %s65 = sphi 0, %s64
      %s81 = sphi 0, %s65
      %s87 = sphi 0, %s89
      %s90 = sphi 0, %s87
      %s91 = sphi 0, %s90
      %s107 = sphi 0, %s91
      %s113 = sphi 0, %s115
      %s116 = sphi 0, %s113
      %s117 = sphi 0, %s116
      %s133 = sphi 0, %s117
      %s137 = sphi 0, %s137
      %s139 = sphi 0, %s137
      %s140 = sphi 0, %s139
      %s154 = sphi 0, %s140
    $region4: #{mixgcn_forward.2} parent=1 // loop_header_branch
      %14 = sbr.rel (%p12) target = $region8
    $region5: #{mixgcn_forward.2} parent=1 // loop_body
      %s16 = ssub.s32 %s11, 1
      %s17 = ssub.s32 %s11, 2
      %s24 = sadd.s32 1, %s19
      %p25 = scmp.ge.s32.totalorder %s24, 3
      %s26 = scalar_select %p25, 0, %s24
      %s27 = sadd.s32 1, %s18
      %s28 = scalar_select %p25, %s27, %s18
      %p29 = scmp.ge.s32.totalorder %s28, 3
      %s30 = scalar_select %p29, 0, %s28
      %s31 = ssub.s32 %s19, %s26
      %s32 = ssub.s32 %s18, %s30
      %s33 = sor.u32 %s31, %s32
      %p34 = scmp.eq.s32.totalorder %s33, 0
      %s36 = sadd.s32 %s35, 1
      %s37 = scalar_select %p34, %s35, %s36
      %p40 = pneg %p34
      %p41 = scmp.eq.s32.totalorder %s11, 8
      %p42 = por %p40, %p41
      %p43 = scmp.ne.s32.totalorder %s35, %s38
      %p44 = scmp.eq.s32.totalorder %s11, 0
      %p45 = por %p43, %p44
      %p46 = scmp.ne.s32.totalorder %s35, %s38
      %p47 = scmp.eq.s32.totalorder %s16, 8
      %p48 = por %p46, %p47
      %p49 = scmp.ne.s32.totalorder %s38, %s39
      %p50 = scmp.eq.s32.totalorder %s16, 0
      %p51 = por %p49, %p50
      %p52 = scmp.ne.s32.totalorder %s38, %s39
      %p53 = scmp.eq.s32.totalorder %s17, 8
      %p54 = por %p52, %p53
      %p56 = scmp.ne.s32.totalorder %s39, %s55
      %p57 = scmp.eq.s32.totalorder %s17, 0
      %p58 = por %p56, %p57
      %s59 = ssub.s32 %s18, %s30
      %p60 = scmp.eq.s32.totalorder %s59, 0
      %s62 = sadd.s32 %s61, 1
      %s63 = scalar_select %p60, %s61, %s62
      %p66 = pneg %p60
      %p67 = scmp.eq.s32.totalorder %s11, 8
      %p68 = por %p66, %p67
      %p69 = scmp.ne.s32.totalorder %s61, %s64
      %p70 = scmp.eq.s32.totalorder %s11, 0
      %p71 = por %p69, %p70
      %p72 = scmp.ne.s32.totalorder %s61, %s64
      %p73 = scmp.eq.s32.totalorder %s16, 8
      %p74 = por %p72, %p73
      %p75 = scmp.ne.s32.totalorder %s64, %s65
      %p76 = scmp.eq.s32.totalorder %s16, 0
      %p77 = por %p75, %p76
      %p78 = scmp.ne.s32.totalorder %s64, %s65
      %p79 = scmp.eq.s32.totalorder %s17, 8
      %p80 = por %p78, %p79
      %p82 = scmp.ne.s32.totalorder %s65, %s81
      %p83 = scmp.eq.s32.totalorder %s17, 0
      %p84 = por %p82, %p83
      %s85 = ssub.s32 %s19, %s26
      %p86 = scmp.eq.s32.totalorder %s85, 0
      %s88 = sadd.s32 %s87, 1
      %s89 = scalar_select %p86, %s87, %s88
      %p92 = pneg %p86
      %p93 = scmp.eq.s32.totalorder %s11, 8
      %p94 = por %p92, %p93
      %p95 = scmp.ne.s32.totalorder %s87, %s90
      %p96 = scmp.eq.s32.totalorder %s11, 0
      %p97 = por %p95, %p96
      %p98 = scmp.ne.s32.totalorder %s87, %s90
      %p99 = scmp.eq.s32.totalorder %s16, 8
      %p100 = por %p98, %p99
      %p101 = scmp.ne.s32.totalorder %s90, %s91
      %p102 = scmp.eq.s32.totalorder %s16, 0
      %p103 = por %p101, %p102
      %p104 = scmp.ne.s32.totalorder %s90, %s91
      %p105 = scmp.eq.s32.totalorder %s17, 8
      %p106 = por %p104, %p105
      %p108 = scmp.ne.s32.totalorder %s91, %s107
      %p109 = scmp.eq.s32.totalorder %s17, 0
      %p110 = por %p108, %p109
      %s111 = ssub.s32 %s18, %s30
      %p112 = scmp.eq.s32.totalorder %s111, 0
      %s114 = sadd.s32 %s113, 1
      %s115 = scalar_select %p112, %s113, %s114
      %p118 = pneg %p112
      %p119 = scmp.eq.s32.totalorder %s11, 8
      %p120 = por %p118, %p119
      %p121 = scmp.ne.s32.totalorder %s113, %s116
      %p122 = scmp.eq.s32.totalorder %s11, 0
      %p123 = por %p121, %p122
      %p124 = scmp.ne.s32.totalorder %s113, %s116
      %p125 = scmp.eq.s32.totalorder %s16, 8
      %p126 = por %p124, %p125
      %p127 = scmp.ne.s32.totalorder %s116, %s117
      %p128 = scmp.eq.s32.totalorder %s16, 0
      %p129 = por %p127, %p128
      %p130 = scmp.ne.s32.totalorder %s116, %s117
      %p131 = scmp.eq.s32.totalorder %s17, 8
      %p132 = por %p130, %p131
      %p134 = scmp.ne.s32.totalorder %s117, %s133
      %p135 = scmp.eq.s32.totalorder %s17, 0
      %p136 = por %p134, %p135
      %s138 = sadd.s32 %s137, 1
      %p141 = scmp.eq.s32.totalorder %s11, 8
      %p142 = scmp.ne.s32.totalorder %s137, %s139
      %p143 = scmp.eq.s32.totalorder %s11, 0
      %p144 = por %p142, %p143
      %p145 = scmp.ne.s32.totalorder %s137, %s139
      %p146 = scmp.eq.s32.totalorder %s16, 8
      %p147 = por %p145, %p146
      %p148 = scmp.ne.s32.totalorder %s139, %s140
      %p149 = scmp.eq.s32.totalorder %s16, 0
      %p150 = por %p148, %p149
      %p151 = scmp.ne.s32.totalorder %s139, %s140
      %p152 = scmp.eq.s32.totalorder %s17, 8
      %p153 = por %p151, %p152
      %p155 = scmp.ne.s32.totalorder %s140, %s154
      %p156 = scmp.eq.s32.totalorder %s17, 0
      %p157 = por %p155, %p156
      %p158 = scmp.le.s32.totalorder 1, %s11
      %p159 = scmp.lt.s32.totalorder %s11, 10
      %p160 = pnand %p158, %p159
      %p161 = pneg %p160
      // Predicated region
      $region9: #{mixgcn_forward.2} parent=5 // pred_check
        _
      $region10: #{mixgcn_forward.2} parent=5 // pred_check_branch
        %163 = sbr.rel (%p160) target = $region12
      $region11: #{mixgcn_forward.2} parent=5 // pred_region
        %s164 = ssub.s32 %s11, 1
      $region12: #{mixgcn_forward.2} parent=5 // pred_fallthru
        _
      %p165 = scmp.lt.s32.totalorder %s11, 9
      // Predicated region
      $region13: #{mixgcn_forward.2} parent=5 // pred_check
        %p166 = pneg %p165
      $region14: #{mixgcn_forward.2} parent=5 // pred_check_branch
        %168 = sbr.rel (%p166) target = $region16
      $region15: #{mixgcn_forward.2} parent=5 // pred_region
        // Predicated region
        $region17: #{mixgcn_forward.2} parent=15 // pred_check
          %p169 = pneg %p45
        $region18: #{mixgcn_forward.2} parent=15 // pred_check_branch
          %171 = sbr.rel (%p169) target = $region20
        $region19: #{mixgcn_forward.2} parent=15 // pred_region
          %s172 = sand.u32 %s35, 1
          %s173 = sand.u32 %s35, 1
          %s174 = smul.addr %s173, 128
          %s175 = scalar_lea.vmem [#allocation2], %s174
          %s176 = smul.u32 16, %s19
          %s177 = smul.u32 2, %s18
          %s178 = smul.addr %s176, 6
          %s179 = sadd.s32 %s177, %s178
          %s180 = smul.addr %s179, 4
          %s181 = scalar_lea.vmem %s0, %s180
          // Predicated region
          $region21: #{mixgcn_forward.2} parent=19 // pred_check
            _
          $region22: #{mixgcn_forward.2} parent=19 // pred_check_branch
            %183 = sbr.rel (0) target = $region24
          $region23: #{mixgcn_forward.2} parent=19 // pred_region
            // Predicated region
            $region25: #{mixgcn_forward.2} parent=23 // pred_check
              _
            $region26: #{mixgcn_forward.2} parent=23 // pred_check_branch
              %185 = sbr.rel (0) target = $region28
            $region27: #{mixgcn_forward.2} parent=23 // pred_region
              // Predicated region
              $region40: #{mixgcn_forward.2} parent=27 // pred_check
                _
              $region41: #{mixgcn_forward.2} parent=27 // pred_check_branch
                %230 = sbr.rel (0) target = $region43
              $region42: #{mixgcn_forward.2} parent=27 // pred_region
                loop: start=0, step=1, limit=1
                $region44: #{mixgcn_forward.2} parent=42 // loop_pre_header
                  _
                $region45: #{mixgcn_forward.2} parent=42 // loop_header
                  %s232 = sphi 0, %s236
                  %p233 = scmp.ge.s32.totalorder %s232, 1
                  %s237 = sphi %s181, %s181
                  %s238 = sphi %s175, %s175
                $region46: #{mixgcn_forward.2} parent=42 // loop_header_branch
                  %235 = sbr.rel (%p233) target = $region50
                $region47: #{mixgcn_forward.2} parent=42 // loop_body
                  %v239 = vld [vmem:[%s237] sm:$0xff]
                  %240 = vst [vmem:[%s238] sm:$0xff] %v239
                  %v241 = vld [vmem:[%s237 + $0x18] sm:$0xff]
                  %242 = vst [vmem:[%s238 + $0x8] sm:$0xff] %v241
                  %v243 = vld [vmem:[%s237 + $0x30] sm:$0xff]
                  %244 = vst [vmem:[%s238 + $0x10] sm:$0xff] %v243
                  %v245 = vld [vmem:[%s237 + $0x48] sm:$0xff]
                  %246 = vst [vmem:[%s238 + $0x18] sm:$0xff] %v245
                  %v247 = vld [vmem:[%s237 + $0x60] sm:$0xff]
                  %248 = vst [vmem:[%s238 + $0x20] sm:$0xff] %v247
                  %v249 = vld [vmem:[%s237 + $0x78] sm:$0xff]
                  %250 = vst [vmem:[%s238 + $0x28] sm:$0xff] %v249
                  %v251 = vld [vmem:[%s237 + $0x90] sm:$0xff]
                  %252 = vst [vmem:[%s238 + $0x30] sm:$0xff] %v251
                  %v253 = vld [vmem:[%s237 + $0xa8] sm:$0xff]
                  %254 = vst [vmem:[%s238 + $0x38] sm:$0xff] %v253
                  %v255 = vld [vmem:[%s237 + $0xc0] sm:$0xff]
                  %256 = vst [vmem:[%s238 + $0x40] sm:$0xff] %v255
                  %v257 = vld [vmem:[%s237 + $0xd8] sm:$0xff]
                  %258 = vst [vmem:[%s238 + $0x48] sm:$0xff] %v257
                  %v259 = vld [vmem:[%s237 + $0xf0] sm:$0xff]
                  %260 = vst [vmem:[%s238 + $0x50] sm:$0xff] %v259
                  %v261 = vld [vmem:[%s237 + $0x108] sm:$0xff]
                  %262 = vst [vmem:[%s238 + $0x58] sm:$0xff] %v261
                  %v263 = vld [vmem:[%s237 + $0x120] sm:$0xff]
                  %264 = vst [vmem:[%s238 + $0x60] sm:$0xff] %v263
                  %v265 = vld [vmem:[%s237 + $0x138] sm:$0xff]
                  %266 = vst [vmem:[%s238 + $0x68] sm:$0xff] %v265
                  %v267 = vld [vmem:[%s237 + $0x150] sm:$0xff]
                  %268 = vst [vmem:[%s238 + $0x70] sm:$0xff] %v267
                  %v269 = vld [vmem:[%s237 + $0x168] sm:$0xff]
                  %270 = vst [vmem:[%s238 + $0x78] sm:$0xff] %v269
                $region48: #{mixgcn_forward.2} parent=42 // loop_footer
                  %s236 = sadd.s32 1, %s232
                $region49: #{mixgcn_forward.2} parent=42 // loop_footer_branch
                  %231 = sbr.rel target = $region45
                $region50: #{mixgcn_forward.2} parent=42 // loop_exit
                  _
              $region43: #{mixgcn_forward.2} parent=27 // pred_fallthru
                _
              // Predicated region
              $region51: #{mixgcn_forward.2} parent=27 // pred_check
                _
              $region52: #{mixgcn_forward.2} parent=27 // pred_check_branch
                %272 = sbr.rel target = $region54
              $region53: #{mixgcn_forward.2} parent=27 // pred_region
                _
              $region54: #{mixgcn_forward.2} parent=27 // pred_fallthru
                _
            $region28: #{mixgcn_forward.2} parent=23 // pred_fallthru
              _
            // Predicated region
            $region29: #{mixgcn_forward.2} parent=23 // pred_check
              _
            $region30: #{mixgcn_forward.2} parent=23 // pred_check_branch
              %187 = sbr.rel target = $region32
            $region31: #{mixgcn_forward.2} parent=23 // pred_region
              loop: start=0, step=1, limit=1
              $region33: #{mixgcn_forward.2} parent=31 // loop_pre_header
                _
              $region34: #{mixgcn_forward.2} parent=31 // loop_header
                %s190 = sphi 0, %s194
                %p191 = scmp.ge.s32.totalorder %s190, 1
                %s195 = sphi %s181, %s181
                %s196 = sphi %s175, %s175
              $region35: #{mixgcn_forward.2} parent=31 // loop_header_branch
                %193 = sbr.rel (%p191) target = $region39
              $region36: #{mixgcn_forward.2} parent=31 // loop_body
                %v197 = vld [vmem:[%s195] sm:$0xff]
                %198 = vst [vmem:[%s196] sm:$0xff] %v197
                %v199 = vld [vmem:[%s195 + $0x18] sm:$0xff]
                %200 = vst [vmem:[%s196 + $0x8] sm:$0xff] %v199
                %v201 = vld [vmem:[%s195 + $0x30] sm:$0xff]
                %202 = vst [vmem:[%s196 + $0x10] sm:$0xff] %v201
                %v203 = vld [vmem:[%s195 + $0x48] sm:$0xff]
                %204 = vst [vmem:[%s196 + $0x18] sm:$0xff] %v203
                %v205 = vld [vmem:[%s195 + $0x60] sm:$0xff]
                %206 = vst [vmem:[%s196 + $0x20] sm:$0xff] %v205
                %v207 = vld [vmem:[%s195 + $0x78] sm:$0xff]
                %208 = vst [vmem:[%s196 + $0x28] sm:$0xff] %v207
                %v209 = vld [vmem:[%s195 + $0x90] sm:$0xff]
                %210 = vst [vmem:[%s196 + $0x30] sm:$0xff] %v209
                %v211 = vld [vmem:[%s195 + $0xa8] sm:$0xff]
                %212 = vst [vmem:[%s196 + $0x38] sm:$0xff] %v211
                %v213 = vld [vmem:[%s195 + $0xc0] sm:$0xff]
                %214 = vst [vmem:[%s196 + $0x40] sm:$0xff] %v213
                %v215 = vld [vmem:[%s195 + $0xd8] sm:$0xff]
                %216 = vst [vmem:[%s196 + $0x48] sm:$0xff] %v215
                %v217 = vld [vmem:[%s195 + $0xf0] sm:$0xff]
                %218 = vst [vmem:[%s196 + $0x50] sm:$0xff] %v217
                %v219 = vld [vmem:[%s195 + $0x108] sm:$0xff]
                %220 = vst [vmem:[%s196 + $0x58] sm:$0xff] %v219
                %v221 = vld [vmem:[%s195 + $0x120] sm:$0xff]
                %222 = vst [vmem:[%s196 + $0x60] sm:$0xff] %v221
                %v223 = vld [vmem:[%s195 + $0x138] sm:$0xff]
                %224 = vst [vmem:[%s196 + $0x68] sm:$0xff] %v223
                %v225 = vld [vmem:[%s195 + $0x150] sm:$0xff]
                %226 = vst [vmem:[%s196 + $0x70] sm:$0xff] %v225
                %v227 = vld [vmem:[%s195 + $0x168] sm:$0xff]
                %228 = vst [vmem:[%s196 + $0x78] sm:$0xff] %v227
              $region37: #{mixgcn_forward.2} parent=31 // loop_footer
                %s194 = sadd.s32 1, %s190
              $region38: #{mixgcn_forward.2} parent=31 // loop_footer_branch
                %189 = sbr.rel target = $region34
              $region39: #{mixgcn_forward.2} parent=31 // loop_exit
                _
            $region32: #{mixgcn_forward.2} parent=23 // pred_fallthru
              _
          $region24: #{mixgcn_forward.2} parent=19 // pred_fallthru
            _
          %273 = vnop
        $region20: #{mixgcn_forward.2} parent=15 // pred_fallthru
          _
        // Predicated region
        $region55: #{mixgcn_forward.2} parent=15 // pred_check
          %p274 = pneg %p71
        $region56: #{mixgcn_forward.2} parent=15 // pred_check_branch
          %276 = sbr.rel (%p274) target = $region58
        $region57: #{mixgcn_forward.2} parent=15 // pred_region
          %s277 = smul.u32 32, %s18
          %p278 = scmp.lt.s32.totalorder %s277, 95
          %s279 = scalar_select %p278, %s277, 95
          %s280 = smul.addr %s279, 4
          %s281 = scalar_lea.vmem %s1, %s280
          %s282 = smul.u32 32, %s18
        $region58: #{mixgcn_forward.2} parent=15 // pred_fallthru
          _
        // Predicated region
        $region59: #{mixgcn_forward.2} parent=15 // pred_check
          %p283 = pneg %p97
        $region60: #{mixgcn_forward.2} parent=15 // pred_check_branch
          %285 = sbr.rel (%p283) target = $region62
        $region61: #{mixgcn_forward.2} parent=15 // pred_region
          %s286 = sand.u32 %s87, 1
          %s287 = sand.u32 %s87, 1
          %s288 = smul.addr %s287, 16
          %s289 = scalar_lea.vmem [#allocation3], %s288
          %s290 = smul.addr %s19, 4
          %s291 = scalar_lea.vmem %s2, %s290
          // Predicated region
          $region63: #{mixgcn_forward.2} parent=61 // pred_check
            _
          $region64: #{mixgcn_forward.2} parent=61 // pred_check_branch
            %293 = sbr.rel (0) target = $region66
          $region65: #{mixgcn_forward.2} parent=61 // pred_region
            // Predicated region
            $region67: #{mixgcn_forward.2} parent=65 // pred_check
              _
            $region68: #{mixgcn_forward.2} parent=65 // pred_check_branch
              %295 = sbr.rel target = $region70
            $region69: #{mixgcn_forward.2} parent=65 // pred_region
              // Predicated region
              $region82: #{mixgcn_forward.2} parent=69 // pred_check
                _
              $region83: #{mixgcn_forward.2} parent=69 // pred_check_branch
                %316 = sbr.rel (0) target = $region85
              $region84: #{mixgcn_forward.2} parent=69 // pred_region
                loop: start=0, step=1, limit=1
                $region86: #{mixgcn_forward.2} parent=84 // loop_pre_header
                  _
                $region87: #{mixgcn_forward.2} parent=84 // loop_header
                  %s318 = sphi 0, %s322
                  %p319 = scmp.ge.s32.totalorder %s318, 1
                  %s323 = sphi %s291, %s291
                  %s324 = sphi %s289, %s289
                $region88: #{mixgcn_forward.2} parent=84 // loop_header_branch
                  %321 = sbr.rel (%p319) target = $region92
                $region89: #{mixgcn_forward.2} parent=84 // loop_body
                  _
                $region90: #{mixgcn_forward.2} parent=84 // loop_footer
                  %s322 = sadd.s32 1, %s318
                $region91: #{mixgcn_forward.2} parent=84 // loop_footer_branch
                  %317 = sbr.rel target = $region87
                $region92: #{mixgcn_forward.2} parent=84 // loop_exit
                  _
                loop: start=0, step=1, limit=1
                $region93: #{mixgcn_forward.2} parent=84 // loop_pre_header
                  _
                $region94: #{mixgcn_forward.2} parent=84 // loop_header
                  %s327 = sphi 0, %s331
                  %p328 = scmp.ge.s32.totalorder %s327, 1
                  %s332 = sphi %s291, %s291
                  %s333 = sphi %s289, %s289
                $region95: #{mixgcn_forward.2} parent=84 // loop_header_branch
                  %330 = sbr.rel (%p328) target = $region99
                $region96: #{mixgcn_forward.2} parent=84 // loop_body
                  %v334 = vld [vmem:[%s332] sm:$0xf]
                  %335 = vst [vmem:[%s333] sm:$0xf] %v334
                  %v336 = vld [vmem:[%s332 + $0xc] sm:$0xf]
                  %337 = vst [vmem:[%s333 + $0x4] sm:$0xf] %v336
                  %v338 = vld [vmem:[%s332 + $0x18] sm:$0xf]
                  %339 = vst [vmem:[%s333 + $0x8] sm:$0xf] %v338
                  %v340 = vld [vmem:[%s332 + $0x24] sm:$0xf]
                  %341 = vst [vmem:[%s333 + $0xc] sm:$0xf] %v340
                $region97: #{mixgcn_forward.2} parent=84 // loop_footer
                  %s331 = sadd.s32 1, %s327
                $region98: #{mixgcn_forward.2} parent=84 // loop_footer_branch
                  %326 = sbr.rel target = $region94
                $region99: #{mixgcn_forward.2} parent=84 // loop_exit
                  _
              $region85: #{mixgcn_forward.2} parent=69 // pred_fallthru
                _
            $region70: #{mixgcn_forward.2} parent=65 // pred_fallthru
              _
            // Predicated region
            $region71: #{mixgcn_forward.2} parent=65 // pred_check
              _
            $region72: #{mixgcn_forward.2} parent=65 // pred_check_branch
              %297 = sbr.rel (0) target = $region74
            $region73: #{mixgcn_forward.2} parent=65 // pred_region
              loop: start=0, step=1, limit=1
              $region75: #{mixgcn_forward.2} parent=73 // loop_pre_header
                _
              $region76: #{mixgcn_forward.2} parent=73 // loop_header
                %s300 = sphi 0, %s304
                %p301 = scmp.ge.s32.totalorder %s300, 1
                %s305 = sphi %s291, %s291
                %s306 = sphi %s289, %s289
              $region77: #{mixgcn_forward.2} parent=73 // loop_header_branch
                %303 = sbr.rel (%p301) target = $region81
              $region78: #{mixgcn_forward.2} parent=73 // loop_body
                %v307 = vld [vmem:[%s305] sm:$0xf]
                %308 = vst [vmem:[%s306] sm:$0xf] %v307
                %v309 = vld [vmem:[%s305 + $0xc] sm:$0xf]
                %310 = vst [vmem:[%s306 + $0x4] sm:$0xf] %v309
                %v311 = vld [vmem:[%s305 + $0x18] sm:$0xf]
                %312 = vst [vmem:[%s306 + $0x8] sm:$0xf] %v311
                %v313 = vld [vmem:[%s305 + $0x24] sm:$0xf]
                %314 = vst [vmem:[%s306 + $0xc] sm:$0xf] %v313
              $region79: #{mixgcn_forward.2} parent=73 // loop_footer
                %s304 = sadd.s32 1, %s300
              $region80: #{mixgcn_forward.2} parent=73 // loop_footer_branch
                %299 = sbr.rel target = $region76
              $region81: #{mixgcn_forward.2} parent=73 // loop_exit
                _
            $region74: #{mixgcn_forward.2} parent=65 // pred_fallthru
              _
          $region66: #{mixgcn_forward.2} parent=61 // pred_fallthru
            _
          %342 = vnop
        $region62: #{mixgcn_forward.2} parent=15 // pred_fallthru
          _
      $region16: #{mixgcn_forward.2} parent=5 // pred_fallthru
        _
      %p343 = scmp.le.s32.totalorder 1, %s11
      %p344 = scmp.lt.s32.totalorder %s11, 10
      %p345 = pnand %p343, %p344
      %p346 = pneg %p345
      // Predicated region
      $region100: #{mixgcn_forward.2} parent=5 // pred_check
        _
      $region101: #{mixgcn_forward.2} parent=5 // pred_check_branch
        %348 = sbr.rel (%p345) target = $region103
      $region102: #{mixgcn_forward.2} parent=5 // pred_region
        %s349 = ssub.s32 %s11, 1
        %s350 = sand.u32 %s38, 1
        %s351 = sand.u32 %s38, 1
        %s352 = smul.addr %s351, 128
        %s353 = scalar_lea.vmem [#allocation2], %s352
        // Predicated region
        $region104: #{mixgcn_forward.2} parent=102 // pred_check
          %p354 = pneg %p51
        $region105: #{mixgcn_forward.2} parent=102 // pred_check_branch
          %356 = sbr.rel (%p354) target = $region107
        $region106: #{mixgcn_forward.2} parent=102 // pred_region
          _
        $region107: #{mixgcn_forward.2} parent=102 // pred_fallthru
          _
        %s357 = sand.u32 %s90, 1
        %s358 = sand.u32 %s90, 1
        %s359 = smul.addr %s358, 16
        %s360 = scalar_lea.vmem [#allocation3], %s359
        // Predicated region
        $region108: #{mixgcn_forward.2} parent=102 // pred_check
          %p361 = pneg %p103
        $region109: #{mixgcn_forward.2} parent=102 // pred_check_branch
          %363 = sbr.rel (%p361) target = $region111
        $region110: #{mixgcn_forward.2} parent=102 // pred_region
          _
        $region111: #{mixgcn_forward.2} parent=102 // pred_fallthru
          _
        %s364 = sand.u32 %s38, 1
        %s365 = sand.u32 %s38, 1
        %s366 = smul.addr %s365, 128
        %s367 = scalar_lea.vmem [#allocation2], %s366
        %p368 = pneg %p51
        %p369 = pneg %p48
        %s370 = smul.u32 32, %s20
        %p371 = scmp.lt.s32.totalorder %s370, 95
        %s372 = scalar_select %p371, %s370, 95
        %s373 = smul.addr %s372, 4
        %s374 = scalar_lea.vmem %s1, %s373
        %p375 = pneg %p77
        %p376 = pneg %p74
        %s377 = sand.u32 %s90, 1
        %s378 = sand.u32 %s90, 1
        %s379 = smul.addr %s378, 16
        %s380 = scalar_lea.vmem [#allocation3], %s379
        %p381 = pneg %p103
        %p382 = pneg %p100
        %p383 = pneg %p129
        %p384 = pneg %p126
        %s385 = sand.u32 %s116, 1
        %s386 = sand.u32 %s116, 1
        %s387 = smul.addr %s386, 64
        %s388 = scalar_lea.vmem [#allocation4], %s387
        %p389 = pneg %p150
        %p390 = pneg %p147
        %s391 = smul.u32 16, %s21
        %s392 = smul.u32 2, %s20
        %s393 = smul.u32 32, %s20
        %p394 = scmp.lt.s32.totalorder %s393, 95
        %s395 = scalar_select %p394, %s393, 95
        %s396 = smul.addr %s395, 4
        %s397 = scalar_lea.vmem %s1, %s396
        %s398 = smul.u32 32, %s20
        %s399 = smul.u32 2, %s20
        %s401 = smul.u32 %s21, 128
        %p402 = scmp.eq.s32.totalorder %s21, 0
        // Predicated region
        $region112: #{mixgcn_forward.2} parent=102 // pred_check
          %p403 = pneg %p402
        $region113: #{mixgcn_forward.2} parent=102 // pred_check_branch
          %405 = sbr.rel (%p403) target = $region115
        $region114: #{mixgcn_forward.2} parent=102 // pred_region
          %406 = vst [vmem:[%s388] sm:$0xff] 0.0
          %407 = vst [vmem:[%s388 + $0x8] sm:$0xff] 0.0
          %408 = vst [vmem:[%s388 + $0x10] sm:$0xff] 0.0
          %409 = vst [vmem:[%s388 + $0x18] sm:$0xff] 0.0
          %410 = vst [vmem:[%s388 + $0x20] sm:$0xff] 0.0
          %411 = vst [vmem:[%s388 + $0x28] sm:$0xff] 0.0
          %412 = vst [vmem:[%s388 + $0x30] sm:$0xff] 0.0
          %413 = vst [vmem:[%s388 + $0x38] sm:$0xff] 0.0
        $region115: #{mixgcn_forward.2} parent=102 // pred_fallthru
          _
        %p414 = scmp.eq.s32.totalorder %s20, 0
        // Predicated region
        $region116: #{mixgcn_forward.2} parent=102 // pred_check
          %p415 = pneg %p414
        $region117: #{mixgcn_forward.2} parent=102 // pred_check_branch
          %417 = sbr.rel (%p415) target = $region119
        $region118: #{mixgcn_forward.2} parent=102 // pred_region
          %s418 = scalar_lea.vmem %s4, %s401
          %vm419 = vcmask 261120
          %420 = vst.msk [vmem:[%s418] sm:$0xff] %vm419, 0.0
          %421 = vst.msk [vmem:[%s418 + $0x8] sm:$0xff] %vm419, 0.0
          %422 = vst.msk [vmem:[%s418 + $0x10] sm:$0xff] %vm419, 0.0
          %423 = vst.msk [vmem:[%s418 + $0x18] sm:$0xff] %vm419, 0.0
          %424 = vst.msk [vmem:[%s418 + $0x20] sm:$0xff] %vm419, 0.0
          %425 = vst.msk [vmem:[%s418 + $0x28] sm:$0xff] %vm419, 0.0
          %426 = vst.msk [vmem:[%s418 + $0x30] sm:$0xff] %vm419, 0.0
          %427 = vst.msk [vmem:[%s418 + $0x38] sm:$0xff] %vm419, 0.0
          %428 = vst.msk [vmem:[%s418 + $0x40] sm:$0xff] %vm419, 0.0
          %429 = vst.msk [vmem:[%s418 + $0x48] sm:$0xff] %vm419, 0.0
          %430 = vst.msk [vmem:[%s418 + $0x50] sm:$0xff] %vm419, 0.0
          %431 = vst.msk [vmem:[%s418 + $0x58] sm:$0xff] %vm419, 0.0
          %432 = vst.msk [vmem:[%s418 + $0x60] sm:$0xff] %vm419, 0.0
          %433 = vst.msk [vmem:[%s418 + $0x68] sm:$0xff] %vm419, 0.0
          %434 = vst.msk [vmem:[%s418 + $0x70] sm:$0xff] %vm419, 0.0
          %435 = vst.msk [vmem:[%s418 + $0x78] sm:$0xff] %vm419, 0.0
        $region119: #{mixgcn_forward.2} parent=102 // pred_fallthru
          _
        %v436 = vld [vmem:[%s353] sm:$0xff]
        %v437 = vld [vmem:[%s353 + $0x8] sm:$0xff]
        %v438 = vld [vmem:[%s353 + $0x10] sm:$0xff]
        %v439 = vld [vmem:[%s353 + $0x18] sm:$0xff]
        %v440 = vld [vmem:[%s353 + $0x20] sm:$0xff]
        %v441 = vld [vmem:[%s353 + $0x28] sm:$0xff]
        %v442 = vld [vmem:[%s353 + $0x30] sm:$0xff]
        %v443 = vld [vmem:[%s353 + $0x38] sm:$0xff]
        %v444 = vld [vmem:[%s353 + $0x40] sm:$0xff]
        %v445 = vld [vmem:[%s353 + $0x48] sm:$0xff]
        %v446 = vld [vmem:[%s353 + $0x50] sm:$0xff]
        %v447 = vld [vmem:[%s353 + $0x58] sm:$0xff]
        %v448 = vld [vmem:[%s353 + $0x60] sm:$0xff]
        %v449 = vld [vmem:[%s353 + $0x68] sm:$0xff]
        %v450 = vld [vmem:[%s353 + $0x70] sm:$0xff]
        %v451 = vld [vmem:[%s353 + $0x78] sm:$0xff]
        %v452 = vld [vmem:[%s397] sm:$0xf]
        %v453 = vld [vmem:[%s397 + $0x4] sm:$0xf]
        %v454 = vld [vmem:[%s397 + $0x8] sm:$0xf]
        %v455 = vld [vmem:[%s397 + $0xc] sm:$0xf]
        %v456 = vld [vmem:[%s397 + $0x10] sm:$0xf]
        %v457 = vld [vmem:[%s397 + $0x14] sm:$0xf]
        %v458 = vld [vmem:[%s397 + $0x18] sm:$0xf]
        %v459 = vld [vmem:[%s397 + $0x1c] sm:$0xf]
        %v460 = vld [vmem:[%s397 + $0x20] sm:$0xf]
        %v461 = vld [vmem:[%s397 + $0x24] sm:$0xf]
        %v462 = vld [vmem:[%s397 + $0x28] sm:$0xf]
        %v463 = vld [vmem:[%s397 + $0x2c] sm:$0xf]
        %v464 = vld [vmem:[%s397 + $0x30] sm:$0xf]
        %v465 = vld [vmem:[%s397 + $0x34] sm:$0xf]
        %v466 = vld [vmem:[%s397 + $0x38] sm:$0xf]
        %v467 = vld [vmem:[%s397 + $0x3c] sm:$0xf]
        %v468 = vld [vmem:[%s397 + $0x40] sm:$0xf]
        %v469 = vld [vmem:[%s397 + $0x44] sm:$0xf]
        %v470 = vld [vmem:[%s397 + $0x48] sm:$0xf]
        %v471 = vld [vmem:[%s397 + $0x4c] sm:$0xf]
        %v472 = vld [vmem:[%s397 + $0x50] sm:$0xf]
        %v473 = vld [vmem:[%s397 + $0x54] sm:$0xf]
        %v474 = vld [vmem:[%s397 + $0x58] sm:$0xf]
        %v475 = vld [vmem:[%s397 + $0x5c] sm:$0xf]
        %v476 = vld [vmem:[%s397 + $0x60] sm:$0xf]
        %v477 = vld [vmem:[%s397 + $0x64] sm:$0xf]
        %v478 = vld [vmem:[%s397 + $0x68] sm:$0xf]
        %v479 = vld [vmem:[%s397 + $0x6c] sm:$0xf]
        %v480 = vld [vmem:[%s397 + $0x70] sm:$0xf]
        %v481 = vld [vmem:[%s397 + $0x74] sm:$0xf]
        %v482 = vld [vmem:[%s397 + $0x78] sm:$0xf]
        %v483 = vld [vmem:[%s397 + $0x7c] sm:$0xf]
        %v484 = vld [vmem:[%s360] sm:$0xf]
        %v485 = vld [vmem:[%s360 + $0x4] sm:$0xf]
        %v486 = vld [vmem:[%s360 + $0x8] sm:$0xf]
        %v487 = vld [vmem:[%s360 + $0xc] sm:$0xf]
        %s488 = scalar_lea.vmem %s4, %s401
        %v489 = vld [vmem:[%s488] sm:$0xff]
        %v490 = vld [vmem:[%s488 + $0x8] sm:$0xff]
        %v491 = vld [vmem:[%s488 + $0x10] sm:$0xff]
        %v492 = vld [vmem:[%s488 + $0x18] sm:$0xff]
        %v493 = vld [vmem:[%s488 + $0x20] sm:$0xff]
        %v494 = vld [vmem:[%s488 + $0x28] sm:$0xff]
        %v495 = vld [vmem:[%s488 + $0x30] sm:$0xff]
        %v496 = vld [vmem:[%s488 + $0x38] sm:$0xff]
        %v497 = vld [vmem:[%s488 + $0x40] sm:$0xff]
        %v498 = vld [vmem:[%s488 + $0x48] sm:$0xff]
        %v499 = vld [vmem:[%s488 + $0x50] sm:$0xff]
        %v500 = vld [vmem:[%s488 + $0x58] sm:$0xff]
        %v501 = vld [vmem:[%s488 + $0x60] sm:$0xff]
        %v502 = vld [vmem:[%s488 + $0x68] sm:$0xff]
        %v503 = vld [vmem:[%s488 + $0x70] sm:$0xff]
        %v504 = vld [vmem:[%s488 + $0x78] sm:$0xff]
        %v521 = vunpack.c.l.b16 %v436
        %v522 = vunpack.c.h.b16 %v436
        %v523 = vunpack.c.l.b16 %v437
        %v524 = vunpack.c.h.b16 %v437
        %v525 = vunpack.c.l.b16 %v438
        %v526 = vunpack.c.h.b16 %v438
        %v527 = vunpack.c.l.b16 %v439
        %v528 = vunpack.c.h.b16 %v439
        %v529 = vunpack.c.l.b16 %v440
        %v530 = vunpack.c.h.b16 %v440
        %v531 = vunpack.c.l.b16 %v441
        %v532 = vunpack.c.h.b16 %v441
        %v533 = vunpack.c.l.b16 %v442
        %v534 = vunpack.c.h.b16 %v442
        %v535 = vunpack.c.l.b16 %v443
        %v536 = vunpack.c.h.b16 %v443
        %v537 = vunpack.c.l.b16 %v444
        %v538 = vunpack.c.h.b16 %v444
        %v539 = vunpack.c.l.b16 %v445
        %v540 = vunpack.c.h.b16 %v445
        %v541 = vunpack.c.l.b16 %v446
        %v542 = vunpack.c.h.b16 %v446
        %v543 = vunpack.c.l.b16 %v447
        %v544 = vunpack.c.h.b16 %v447
        %v545 = vunpack.c.l.b16 %v448
        %v546 = vunpack.c.h.b16 %v448
        %v547 = vunpack.c.l.b16 %v449
        %v548 = vunpack.c.h.b16 %v449
        %v549 = vunpack.c.l.b16 %v450
        %v550 = vunpack.c.h.b16 %v450
        %v551 = vunpack.c.l.b16 %v451
        %v552 = vunpack.c.h.b16 %v451
        %v553 = vpack.c.b16 %v523, %v521
        %v554 = vpack.c.b16 %v524, %v522
        %v555 = vpack.c.b16 %v527, %v525
        %v556 = vpack.c.b16 %v528, %v526
        %v557 = vpack.c.b16 %v531, %v529
        %v558 = vpack.c.b16 %v532, %v530
        %v559 = vpack.c.b16 %v535, %v533
        %v560 = vpack.c.b16 %v536, %v534
        %v561 = vpack.c.b16 %v539, %v537
        %v562 = vpack.c.b16 %v540, %v538
        %v563 = vpack.c.b16 %v543, %v541
        %v564 = vpack.c.b16 %v544, %v542
        %v565 = vpack.c.b16 %v547, %v545
        %v566 = vpack.c.b16 %v548, %v546
        %v567 = vpack.c.b16 %v551, %v549
        %v568 = vpack.c.b16 %v552, %v550
        %v617 = vunpack.c.l.b16 %v452
        %v618 = vunpack.c.l.b16 %v453
        %v619 = vunpack.c.l.b16 %v454
        %v620 = vunpack.c.l.b16 %v455
        %v621 = vunpack.c.l.b16 %v456
        %v622 = vunpack.c.l.b16 %v457
        %v623 = vunpack.c.l.b16 %v458
        %v624 = vunpack.c.l.b16 %v459
        %v625 = vunpack.c.l.b16 %v460
        %v626 = vunpack.c.l.b16 %v461
        %v627 = vunpack.c.l.b16 %v462
        %v628 = vunpack.c.l.b16 %v463
        %v629 = vunpack.c.l.b16 %v464
        %v630 = vunpack.c.l.b16 %v465
        %v631 = vunpack.c.l.b16 %v466
        %v632 = vunpack.c.l.b16 %v467
        %v633 = vunpack.c.l.b16 %v468
        %v634 = vunpack.c.l.b16 %v469
        %v635 = vunpack.c.l.b16 %v470
        %v636 = vunpack.c.l.b16 %v471
        %v637 = vunpack.c.l.b16 %v472
        %v638 = vunpack.c.l.b16 %v473
        %v639 = vunpack.c.l.b16 %v474
        %v640 = vunpack.c.l.b16 %v475
        %v641 = vunpack.c.l.b16 %v476
        %v642 = vunpack.c.l.b16 %v477
        %v643 = vunpack.c.l.b16 %v478
        %v644 = vunpack.c.l.b16 %v479
        %v645 = vunpack.c.l.b16 %v480
        %v646 = vunpack.c.l.b16 %v481
        %v647 = vunpack.c.l.b16 %v482
        %v648 = vunpack.c.l.b16 %v483
        %v649 = vpack.c.b16 %v618, %v617
        %v650 = vpack.c.b16 %v620, %v619
        %v651 = vpack.c.b16 %v622, %v621
        %v652 = vpack.c.b16 %v624, %v623
        %v653 = vpack.c.b16 %v626, %v625
        %v654 = vpack.c.b16 %v628, %v627
        %v655 = vpack.c.b16 %v630, %v629
        %v656 = vpack.c.b16 %v632, %v631
        %v657 = vpack.c.b16 %v634, %v633
        %v658 = vpack.c.b16 %v636, %v635
        %v659 = vpack.c.b16 %v638, %v637
        %v660 = vpack.c.b16 %v640, %v639
        %v661 = vpack.c.b16 %v642, %v641
        %v662 = vpack.c.b16 %v644, %v643
        %v663 = vpack.c.b16 %v646, %v645
        %v664 = vpack.c.b16 %v648, %v647
        %681 = vmatprep.subr.bf16.mxu0 0
        %682 = vmatpush1.bf16.msra.mxu0 %v649
        %683 = vmatprep.subr.bf16.mxu0 0
        %684 = vmatpush1.bf16.msra.mxu0 %v650
        %685 = vmatprep.subr.bf16.mxu0 0
        %686 = vmatpush1.bf16.msra.mxu0 %v651
        %687 = vmatprep.subr.bf16.mxu0 0
        %688 = vmatpush1.bf16.msra.mxu0 %v652
        %689 = vmatprep.subr.bf16.mxu0 0
        %690 = vmatpush1.bf16.msra.mxu0 %v653
        %691 = vmatprep.subr.bf16.mxu0 0
        %692 = vmatpush1.bf16.msra.mxu0 %v654
        %693 = vmatprep.subr.bf16.mxu0 0
        %694 = vmatpush1.bf16.msra.mxu0 %v655
        %695 = vmatprep.subr.bf16.mxu0 0
        %696 = vmatpush1.bf16.msra.mxu0 %v656
        %697 = vmatprep.subr.bf16.mxu0 0
        %698 = vmatpush1.bf16.msra.mxu0 %v657
        %699 = vmatprep.subr.bf16.mxu0 0
        %700 = vmatpush1.bf16.msra.mxu0 %v658
        %701 = vmatprep.subr.bf16.mxu0 0
        %702 = vmatpush1.bf16.msra.mxu0 %v659
        %703 = vmatprep.subr.bf16.mxu0 0
        %704 = vmatpush1.bf16.msra.mxu0 %v660
        %705 = vmatprep.subr.bf16.mxu0 0
        %706 = vmatpush1.bf16.msra.mxu0 %v661
        %707 = vmatprep.subr.bf16.mxu0 0
        %708 = vmatpush1.bf16.msra.mxu0 %v662
        %709 = vmatprep.subr.bf16.mxu0 0
        %710 = vmatpush1.bf16.msra.mxu0 %v663
        %711 = vmatprep.subr.bf16.mxu0 0
        %712 = vmatpush1.bf16.msra.mxu0 %v664
        %713 = vmatprep.mubr.bf16.mxu0 %v554
        %714 = vmatmul.mubr.bf16.gmra.mrb[0].mxu0 %v553
        %v715 = vpop.f32.mrb[0].mxu0
        %v716 = vadd.f32 0.0, %v715
        %v717 = vpop.f32.mrb[0].mxu0
        %v718 = vpop.f32.mrb[0].mxu0
        %v719 = vadd.f32 0.0, %v718
        %v720 = vpop.f32.mrb[0].mxu0
        %721 = vmatprep.mubr.bf16.mxu0 %v556
        %722 = vmatmul.mubr.bf16.gmra.mrb[0].mxu0 %v555
        %v723 = vpop.f32.mrb[0].mxu0
        %v724 = vadd.f32 0.0, %v723
        %v725 = vpop.f32.mrb[0].mxu0
        %v726 = vpop.f32.mrb[0].mxu0
        %v727 = vadd.f32 0.0, %v726
        %v728 = vpop.f32.mrb[0].mxu0
        %729 = vmatprep.mubr.bf16.mxu0 %v558
        %730 = vmatmul.mubr.bf16.gmra.mrb[0].mxu0 %v557
        %v731 = vpop.f32.mrb[0].mxu0
        %v732 = vadd.f32 0.0, %v731
        %v733 = vpop.f32.mrb[0].mxu0
        %v734 = vpop.f32.mrb[0].mxu0
        %v735 = vadd.f32 0.0, %v734
        %v736 = vpop.f32.mrb[0].mxu0
        %737 = vmatprep.mubr.bf16.mxu0 %v560
        %738 = vmatmul.mubr.bf16.gmra.mrb[0].mxu0 %v559
        %v739 = vpop.f32.mrb[0].mxu0
        %v740 = vadd.f32 0.0, %v739
        %v741 = vpop.f32.mrb[0].mxu0
        %v742 = vpop.f32.mrb[0].mxu0
        %v743 = vadd.f32 0.0, %v742
        %v744 = vpop.f32.mrb[0].mxu0
        %745 = vmatprep.mubr.bf16.mxu0 %v562
        %746 = vmatmul.mubr.bf16.gmra.mrb[0].mxu0 %v561
        %v747 = vpop.f32.mrb[0].mxu0
        %v748 = vadd.f32 0.0, %v747
        %v749 = vpop.f32.mrb[0].mxu0
        %v750 = vpop.f32.mrb[0].mxu0
        %v751 = vadd.f32 0.0, %v750
        %v752 = vpop.f32.mrb[0].mxu0
        %753 = vmatprep.mubr.bf16.mxu0 %v564
        %754 = vmatmul.mubr.bf16.gmra.mrb[0].mxu0 %v563
        %v755 = vpop.f32.mrb[0].mxu0
        %v756 = vadd.f32 0.0, %v755
        %v757 = vpop.f32.mrb[0].mxu0
        %v758 = vpop.f32.mrb[0].mxu0
        %v759 = vadd.f32 0.0, %v758
        %v760 = vpop.f32.mrb[0].mxu0
        %761 = vmatprep.mubr.bf16.mxu0 %v566
        %762 = vmatmul.mubr.bf16.gmra.mrb[0].mxu0 %v565
        %v763 = vpop.f32.mrb[0].mxu0
        %v764 = vadd.f32 0.0, %v763
        %v765 = vpop.f32.mrb[0].mxu0
        %v766 = vpop.f32.mrb[0].mxu0
        %v767 = vadd.f32 0.0, %v766
        %v768 = vpop.f32.mrb[0].mxu0
        %769 = vmatprep.mubr.bf16.mxu0 %v568
        %770 = vmatmul.mubr.bf16.gmra.mrb[0].mxu0 %v567
        %v771 = vpop.f32.mrb[0].mxu0
        %v772 = vadd.f32 0.0, %v771
        %v773 = vpop.f32.mrb[0].mxu0
        %v774 = vpop.f32.mrb[0].mxu0
        %v775 = vadd.f32 0.0, %v774
        %v776 = vpop.f32.mrb[0].mxu0
        %777 = vdwg.mxu0
        %v778 = vadd.f32 %v489, %v716
        %v779 = vadd.f32 %v490, %v719
        %v780 = vadd.f32 %v491, %v724
        %v781 = vadd.f32 %v492, %v727
        %v782 = vadd.f32 %v493, %v732
        %v783 = vadd.f32 %v494, %v735
        %v784 = vadd.f32 %v495, %v740
        %v785 = vadd.f32 %v496, %v743
        %v786 = vadd.f32 %v497, %v748
        %v787 = vadd.f32 %v498, %v751
        %v788 = vadd.f32 %v499, %v756
        %v789 = vadd.f32 %v500, %v759
        %v790 = vadd.f32 %v501, %v764
        %v791 = vadd.f32 %v502, %v767
        %v792 = vadd.f32 %v503, %v772
        %v793 = vadd.f32 %v504, %v775
        %vm794 = vcmask 261120
        %795 = vst.msk [vmem:[%s488] sm:$0xff] %vm794, %v778
        %796 = vst.msk [vmem:[%s488 + $0x8] sm:$0xff] %vm794, %v779
        %797 = vst.msk [vmem:[%s488 + $0x10] sm:$0xff] %vm794, %v780
        %798 = vst.msk [vmem:[%s488 + $0x18] sm:$0xff] %vm794, %v781
        %799 = vst.msk [vmem:[%s488 + $0x20] sm:$0xff] %vm794, %v782
        %800 = vst.msk [vmem:[%s488 + $0x28] sm:$0xff] %vm794, %v783
        %801 = vst.msk [vmem:[%s488 + $0x30] sm:$0xff] %vm794, %v784
        %802 = vst.msk [vmem:[%s488 + $0x38] sm:$0xff] %vm794, %v785
        %803 = vst.msk [vmem:[%s488 + $0x40] sm:$0xff] %vm794, %v786
        %804 = vst.msk [vmem:[%s488 + $0x48] sm:$0xff] %vm794, %v787
        %805 = vst.msk [vmem:[%s488 + $0x50] sm:$0xff] %vm794, %v788
        %806 = vst.msk [vmem:[%s488 + $0x58] sm:$0xff] %vm794, %v789
        %807 = vst.msk [vmem:[%s488 + $0x60] sm:$0xff] %vm794, %v790
        %808 = vst.msk [vmem:[%s488 + $0x68] sm:$0xff] %vm794, %v791
        %809 = vst.msk [vmem:[%s488 + $0x70] sm:$0xff] %vm794, %v792
        %810 = vst.msk [vmem:[%s488 + $0x78] sm:$0xff] %vm794, %v793
        %v811 = vld [vmem:[%s388] sm:$0xff]
        %v812 = vld [vmem:[%s388 + $0x8] sm:$0xff]
        %v813 = vld [vmem:[%s388 + $0x10] sm:$0xff]
        %v814 = vld [vmem:[%s388 + $0x18] sm:$0xff]
        %v815 = vld [vmem:[%s388 + $0x20] sm:$0xff]
        %v816 = vld [vmem:[%s388 + $0x28] sm:$0xff]
        %v817 = vld [vmem:[%s388 + $0x30] sm:$0xff]
        %v818 = vld [vmem:[%s388 + $0x38] sm:$0xff]
        %v823 = vunpack.c.l.b16 %v484
        %v824 = vunpack.c.l.b16 %v485
        %v825 = vunpack.c.l.b16 %v486
        %v826 = vunpack.c.l.b16 %v487
        %v827 = vpack.c.b16 %v824, %v823
        %v828 = vpack.c.b16 %v826, %v825
        %831 = vmatprep.subr.bf16.mxu0 %v554
        %832 = vmatpush1.bf16.msra.mxu0 %v553
        %833 = vmatprep.subr.bf16.mxu0 %v556
        %834 = vmatpush1.bf16.msra.mxu0 %v555
        %835 = vmatprep.subr.bf16.mxu0 %v558
        %836 = vmatpush1.bf16.msra.mxu0 %v557
        %837 = vmatprep.subr.bf16.mxu0 %v560
        %838 = vmatpush1.bf16.msra.mxu0 %v559
        %839 = vmatprep.subr.bf16.mxu0 %v562
        %840 = vmatpush1.bf16.msra.mxu0 %v561
        %841 = vmatprep.subr.bf16.mxu0 %v564
        %842 = vmatpush1.bf16.msra.mxu0 %v563
        %843 = vmatprep.subr.bf16.mxu0 %v566
        %844 = vmatpush1.bf16.msra.mxu0 %v565
        %845 = vmatprep.subr.bf16.mxu0 %v568
        %846 = vmatpush1.bf16.msra.mxu0 %v567
        %847 = vmatprep.subr.bf16.mxu0 0
        %848 = vmatpush1.bf16.msra.mxu0 0
        %849 = vmatprep.subr.bf16.mxu0 0
        %850 = vmatpush1.bf16.msra.mxu0 0
        %851 = vmatprep.subr.bf16.mxu0 0
        %852 = vmatpush1.bf16.msra.mxu0 0
        %853 = vmatprep.subr.bf16.mxu0 0
        %854 = vmatpush1.bf16.msra.mxu0 0
        %855 = vmatprep.subr.bf16.mxu0 0
        %856 = vmatpush1.bf16.msra.mxu0 0
        %857 = vmatprep.subr.bf16.mxu0 0
        %858 = vmatpush1.bf16.msra.mxu0 0
        %859 = vmatprep.subr.bf16.mxu0 0
        %860 = vmatpush1.bf16.msra.mxu0 0
        %861 = vmatprep.subr.bf16.mxu0 0
        %862 = vmatpush1.bf16.msra.mxu0 0
        %863 = vmatprep.mubr.bf16.mxu0 0
        %864 = vmatmul.mubr.bf16.gmra.mrb[0].mxu0 %v827
        %v865 = vpop.f32.mrb[0].mxu0
        %v866 = vadd.f32 0.0, %v865
        %v867 = vpop.f32.mrb[0].mxu0
        %v868 = vadd.f32 0.0, %v867
        %v869 = vpop.f32.mrb[0].mxu0
        %v870 = vadd.f32 0.0, %v869
        %v871 = vpop.f32.mrb[0].mxu0
        %v872 = vadd.f32 0.0, %v871
        %873 = vmatprep.mubr.bf16.mxu0 0
        %874 = vmatmul.mubr.bf16.gmra.mrb[0].mxu0 %v828
        %v875 = vpop.f32.mrb[0].mxu0
        %v876 = vadd.f32 0.0, %v875
        %v877 = vpop.f32.mrb[0].mxu0
        %v878 = vadd.f32 0.0, %v877
        %v879 = vpop.f32.mrb[0].mxu0
        %v880 = vadd.f32 0.0, %v879
        %v881 = vpop.f32.mrb[0].mxu0
        %v882 = vadd.f32 0.0, %v881
        %883 = vdwg.mxu0
        %v884 = vadd.f32 %v811, %v866
        %v885 = vadd.f32 %v812, %v868
        %v886 = vadd.f32 %v813, %v870
        %v887 = vadd.f32 %v814, %v872
        %v888 = vadd.f32 %v815, %v876
        %v889 = vadd.f32 %v816, %v878
        %v890 = vadd.f32 %v817, %v880
        %v891 = vadd.f32 %v818, %v882
        %892 = vst [vmem:[%s388] sm:$0xff] %v884
        %893 = vst [vmem:[%s388 + $0x8] sm:$0xff] %v885
        %894 = vst [vmem:[%s388 + $0x10] sm:$0xff] %v886
        %895 = vst [vmem:[%s388 + $0x18] sm:$0xff] %v887
        %896 = vst [vmem:[%s388 + $0x20] sm:$0xff] %v888
        %897 = vst [vmem:[%s388 + $0x28] sm:$0xff] %v889
        %898 = vst [vmem:[%s388 + $0x30] sm:$0xff] %v890
        %899 = vst [vmem:[%s388 + $0x38] sm:$0xff] %v891
        %s900 = sand.u32 %s116, 1
        %s901 = sand.u32 %s116, 1
        %s902 = smul.addr %s901, 64
        %s903 = scalar_lea.vmem [#allocation4], %s902
        // Predicated region
        $region120: #{mixgcn_forward.2} parent=102 // pred_check
          %p904 = pneg %p126
        $region121: #{mixgcn_forward.2} parent=102 // pred_check_branch
          %906 = sbr.rel (%p904) target = $region123
        $region122: #{mixgcn_forward.2} parent=102 // pred_region
          %s907 = smul.u32 2, %s20
          %s908 = smul.addr %s907, 8
          %s909 = scalar_lea.vmem %s3, %s908
          // Predicated region
          $region124: #{mixgcn_forward.2} parent=122 // pred_check
            _
          $region125: #{mixgcn_forward.2} parent=122 // pred_check_branch
            %911 = sbr.rel (0) target = $region127
          $region126: #{mixgcn_forward.2} parent=122 // pred_region
            // Predicated region
            $region128: #{mixgcn_forward.2} parent=126 // pred_check
              _
            $region129: #{mixgcn_forward.2} parent=126 // pred_check_branch
              %913 = sbr.rel (0) target = $region131
            $region130: #{mixgcn_forward.2} parent=126 // pred_region
              loop: start=0, step=1, limit=1
              $region132: #{mixgcn_forward.2} parent=130 // loop_pre_header
                _
              $region133: #{mixgcn_forward.2} parent=130 // loop_header
                %s915 = sphi 0, %s919
                %p916 = scmp.ge.s32.totalorder %s915, 1
                %s920 = sphi %s903, %s903
                %s921 = sphi %s909, %s909
              $region134: #{mixgcn_forward.2} parent=130 // loop_header_branch
                %918 = sbr.rel (%p916) target = $region138
              $region135: #{mixgcn_forward.2} parent=130 // loop_body
                %v922 = vld [vmem:[%s920] sm:$0xff]
                %923 = vst [vmem:[%s921] sm:$0xff] %v922
                %v924 = vld [vmem:[%s920 + $0x8] sm:$0xff]
                %925 = vst [vmem:[%s921 + $0x8] sm:$0xff] %v924
                %v926 = vld [vmem:[%s920 + $0x10] sm:$0xff]
                %927 = vst [vmem:[%s921 + $0x30] sm:$0xff] %v926
                %v928 = vld [vmem:[%s920 + $0x18] sm:$0xff]
                %929 = vst [vmem:[%s921 + $0x38] sm:$0xff] %v928
                %v930 = vld [vmem:[%s920 + $0x20] sm:$0xff]
                %931 = vst [vmem:[%s921 + $0x60] sm:$0xff] %v930
                %v932 = vld [vmem:[%s920 + $0x28] sm:$0xff]
                %933 = vst [vmem:[%s921 + $0x68] sm:$0xff] %v932
                %v934 = vld [vmem:[%s920 + $0x30] sm:$0xff]
                %935 = vst [vmem:[%s921 + $0x90] sm:$0xff] %v934
                %v936 = vld [vmem:[%s920 + $0x38] sm:$0xff]
                %937 = vst [vmem:[%s921 + $0x98] sm:$0xff] %v936
              $region136: #{mixgcn_forward.2} parent=130 // loop_footer
                %s919 = sadd.s32 1, %s915
              $region137: #{mixgcn_forward.2} parent=130 // loop_footer_branch
                %914 = sbr.rel target = $region133
              $region138: #{mixgcn_forward.2} parent=130 // loop_exit
                _
            $region131: #{mixgcn_forward.2} parent=126 // pred_fallthru
              _
            // Predicated region
            $region139: #{mixgcn_forward.2} parent=126 // pred_check
              _
            $region140: #{mixgcn_forward.2} parent=126 // pred_check_branch
              %939 = sbr.rel target = $region142
            $region141: #{mixgcn_forward.2} parent=126 // pred_region
              _
            $region142: #{mixgcn_forward.2} parent=126 // pred_fallthru
              _
          $region127: #{mixgcn_forward.2} parent=122 // pred_fallthru
            _
          %940 = vnop
        $region123: #{mixgcn_forward.2} parent=102 // pred_fallthru
          _
        // Predicated region
        $region143: #{mixgcn_forward.2} parent=102 // pred_check
          %p941 = pneg %p147
        $region144: #{mixgcn_forward.2} parent=102 // pred_check_branch
          %943 = sbr.rel (%p941) target = $region146
        $region145: #{mixgcn_forward.2} parent=102 // pred_region
          _
        $region146: #{mixgcn_forward.2} parent=102 // pred_fallthru
          _
        // Predicated region
        $region147: #{mixgcn_forward.2} parent=102 // pred_check
          %p944 = pneg %p147
        $region148: #{mixgcn_forward.2} parent=102 // pred_check_branch
          %946 = sbr.rel (%p944) target = $region150
        $region149: #{mixgcn_forward.2} parent=102 // pred_region
          _
        $region150: #{mixgcn_forward.2} parent=102 // pred_fallthru
          _
      $region103: #{mixgcn_forward.2} parent=5 // pred_fallthru
        _
      %p947 = scmp.le.s32.totalorder 2, %s11
      // Predicated region
      $region151: #{mixgcn_forward.2} parent=5 // pred_check
        %p948 = pneg %p947
      $region152: #{mixgcn_forward.2} parent=5 // pred_check_branch
        %950 = sbr.rel (%p948) target = $region154
      $region153: #{mixgcn_forward.2} parent=5 // pred_region
        %s951 = ssub.s32 %s11, 2
        // Predicated region
        $region155: #{mixgcn_forward.2} parent=153 // pred_check
          %p952 = pneg %p132
        $region156: #{mixgcn_forward.2} parent=153 // pred_check_branch
          %954 = sbr.rel (%p952) target = $region158
        $region157: #{mixgcn_forward.2} parent=153 // pred_region
          %s955 = sand.u32 %s117, 1
          %s956 = sand.u32 %s117, 1
          %s957 = smul.addr %s956, 64
          %s958 = scalar_lea.vmem [#allocation4], %s957
        $region158: #{mixgcn_forward.2} parent=153 // pred_fallthru
          _
      $region154: #{mixgcn_forward.2} parent=5 // pred_fallthru
        _
    $region6: #{mixgcn_forward.2} parent=1 // loop_footer
      %s15 = sadd.s32 1, %s11
    $region7: #{mixgcn_forward.2} parent=1 // loop_footer_branch
      %10 = sbr.rel target = $region3
    $region8: #{mixgcn_forward.2} parent=1 // loop_exit
      _

</llo_original>
